<compile_context>
chip_gen: v6e
topology: v6e:2x2x1
jax: 0.10.0
libtpu: 0.0.40
codegen_flags: <defaults>
</compile_context>

<pallas_src>
import jax
import jax.numpy as jnp
from jax.experimental import pallas as pl
from jax.experimental.pallas import tpu as pltpu


def _seq_gclstm_kernel(x_ref, a_ref, wx_ref, wl_ref, wr_ref, b_ref,
                       h0_ref, c0_ref, h_out_ref, c_out_ref):
    """All layers of the stacked GC-LSTM in one VMEM-resident kernel.

    Shapes (L = layers, N = nodes, C = out_channels, K0 = max(Cin, C)):
      x_ref   [N, K0]      bf16  layer-0 input, zero-padded to K0 columns
      a_ref   [N, N]       bf16  row-normalized adjacency (mean aggregation)
      wx_ref  [L, K0, 4C]  bf16  input->gates weights (rows zero-padded to K0)
      wl_ref  [L, C, 4C]   bf16  aggregated-neighbors->gates weights
      wr_ref  [L, C, 4C]   bf16  self/root->gates weights
      b_ref   [L, 1, 4C]   f32   gate bias
      h0/c0   [L, N, C]    f32   initial hidden / cell state (aliased w/ outs)
      h_out/c_out [L,N,C]  f32   final (h, c) of every layer
    """
    num_layers = wx_ref.shape[0]     # static
    cout = wl_ref.shape[1]           # static
    k0 = wx_ref.shape[1]             # static

    a = a_ref[...]                   # [N, N] bf16, loaded once

    prev_h_bf = None                 # previous layer's output h (bf16)
    for l in range(num_layers):      # static unroll — L is small
        h = h0_ref[l]                # [N, C] f32
        c = c0_ref[l]                # [N, C] f32
        h_bf = h.astype(jnp.bfloat16)         # cast once, reused twice

        # SAGE-style mean aggregation of this layer's hidden state (bf16 MXU).
        agg = jnp.dot(a, h_bf, preferred_element_type=jnp.float32)   # [N,C] f32

        if l == 0:
            inp = x_ref[...]                                          # [N,K0]
        else:
            inp = prev_h_bf                                           # [N,C]
            if cout < k0:   # only traced when Cin > Cout
                inp = jnp.concatenate(
                    [inp, jnp.zeros((inp.shape[0], k0 - cout), jnp.bfloat16)],
                    axis=-1)

        # Three dense-K MXU dots summed into one f32 accumulator (no scratch).
        z = (jnp.dot(inp, wx_ref[l], preferred_element_type=jnp.float32)
             + jnp.dot(agg.astype(jnp.bfloat16), wl_ref[l],
                       preferred_element_type=jnp.float32)
             + jnp.dot(h_bf, wr_ref[l], preferred_element_type=jnp.float32)
             + b_ref[l])                                              # [N,4C]

        zi = z[:, 0 * cout:1 * cout]
        zf = z[:, 1 * cout:2 * cout]
        zt = z[:, 2 * cout:3 * cout]
        zo = z[:, 3 * cout:4 * cout]

        c_new = jax.nn.sigmoid(zf) * c + jax.nn.sigmoid(zi) * jnp.tanh(zt)
        h_new = jax.nn.sigmoid(zo) * jnp.tanh(c_new)

        h_out_ref[l] = h_new
        c_out_ref[l] = c_new
        prev_h_bf = h_new.astype(jnp.bfloat16)


def _pad_rows(w, k0):
    k = w.shape[0]
    return jnp.pad(w, ((0, k0 - k), (0, 0))) if k < k0 else w


def seq_gclstm_forward(x, a_norm, params, hidden_state=None):
    """Mirrors SeqGCLSTM.forward (seq_len == 1, return_all_layers=True).

    Single fused pallas_call: all layers run back-to-back with h/c kept
    on-chip; only the final per-layer states are written back (in place,
    aliased onto h0/c0). Returns [(h_layer0, c_layer0), (h_layer1, c_layer1), ...].
    """
    n, cin = x.shape
    cout = params[0]["wl"].shape[0]
    num_layers = len(params)
    k0 = max(cin, cout)

    # bf16 operands for the MXU (f32 accumulation / gate math inside kernel).
    x_pad = jnp.pad(x, ((0, 0), (0, k0 - cin))).astype(jnp.bfloat16)
    a_bf16 = a_norm.astype(jnp.bfloat16)

    wx_stack = jnp.stack([_pad_rows(p["wx"], k0) for p in params]
                         ).astype(jnp.bfloat16)                     # [L,K0,4C]
    wl_stack = jnp.stack([p["wl"] for p in params]).astype(jnp.bfloat16)
    wr_stack = jnp.stack([p["wr"] for p in params]).astype(jnp.bfloat16)
    b_stack = jnp.stack([p["b"] for p in params])                   # [L,1,4C] f32

    if hidden_state is None:
        h0 = jnp.zeros((num_layers, n, cout), jnp.float32)
        c0 = jnp.zeros((num_layers, n, cout), jnp.float32)
    else:
        h0 = jnp.stack([h for h, _ in hidden_state]).astype(jnp.float32)
        c0 = jnp.stack([c for _, c in hidden_state]).astype(jnp.float32)

    vmem = pl.BlockSpec(memory_space=pltpu.MemorySpace.VMEM)
    h_all, c_all = pl.pallas_call(
        _seq_gclstm_kernel,
        in_specs=[vmem] * 8,
        out_specs=[vmem, vmem],
        out_shape=[
            jax.ShapeDtypeStruct((num_layers, n, cout), jnp.float32),
            jax.ShapeDtypeStruct((num_layers, n, cout), jnp.float32),
        ],
        input_output_aliases={6: 0, 7: 1},   # h0 -> h_out, c0 -> c_out in place
    )(x_pad, a_bf16, wx_stack, wl_stack, wr_stack, b_stack, h0, c0)

    return [(h_all[l], c_all[l]) for l in range(num_layers)]


def init_seq_gclstm_params(key, in_channels, out_channels, num_layers):
    """Deterministic synthetic parameters (shapes follow the module __init__).

    Gate column order within the 4*Cout axis is (i, f, candidate, o)."""
    params = []
    for layer in range(num_layers):
        cin = in_channels if layer == 0 else out_channels
        key, k1, k2, k3, k4 = jax.random.split(key, 5)
        wx = (jax.random.normal(k1, (cin, 4 * out_channels), jnp.float32)
              / jnp.sqrt(jnp.float32(cin)))
        wl = (jax.random.normal(k2, (out_channels, 4 * out_channels), jnp.float32)
              / jnp.sqrt(jnp.float32(out_channels)))
        wr = (jax.random.normal(k3, (out_channels, 4 * out_channels), jnp.float32)
              / jnp.sqrt(jnp.float32(out_channels)))
        b = 0.1 * jax.random.normal(k4, (1, 4 * out_channels), jnp.float32)
        params.append({"wx": wx, "wl": wl, "wr": wr, "b": b})
    return params


def build_normalized_adjacency(key, n):
    """Random directed graph, NO self loops, row-normalized (SAGE mean aggr).

    The root/self contribution is carried only by Wr (lin_r), as in SAGEConv."""
    adj = (jax.random.uniform(key, (n, n)) < 0.3).astype(jnp.float32)
    adj = adj * (1.0 - jnp.eye(n, dtype=jnp.float32))
    deg = jnp.maximum(jnp.sum(adj, axis=1, keepdims=True), 1.0)
    return adj / deg


def seq_gclstm_reference(x, a_norm, params, hidden_state):
    """Pure-JAX reference; matmul operands rounded to bf16 to match the kernel."""
    def q(v):
        return v.astype(jnp.bfloat16).astype(jnp.float32)

    n = x.shape[0]
    cur = x
    out = []
    for l, p in enumerate(params):
        cout = p["wl"].shape[0]
        if hidden_state is None:
            h = jnp.zeros((n, cout), jnp.float32)
            c = jnp.zeros((n, cout), jnp.float32)
        else:
            h, c = hidden_state[l]
        agg = q(a_norm) @ q(h)
        z = (q(cur) @ q(p["wx"]) + q(agg) @ q(p["wl"]) + q(h) @ q(p["wr"]) + p["b"])
        zi, zf, zt, zo = jnp.split(z, 4, axis=1)
        c = jax.nn.sigmoid(zf) * c + jax.nn.sigmoid(zi) * jnp.tanh(zt)
        h = jax.nn.sigmoid(zo) * jnp.tanh(c)
        out.append((h, c))
        cur = h
    return out


if __name__ == "__main__":
    key = jax.random.PRNGKey(0)
    k_x, k_adj, k_p, k_h = jax.random.split(key, 4)

    num_nodes = 16
    in_channels = 4
    out_channels = 32
    num_layers = 2

    x = jax.random.normal(k_x, (num_nodes, in_channels), jnp.float32)
    a_norm = build_normalized_adjacency(k_adj, num_nodes)
    params = init_seq_gclstm_params(k_p, in_channels, out_channels, num_layers)

    # Non-zero initial hidden state so the A@h / Wl / Wr paths are exercised.
    hidden_state = []
    for _ in range(num_layers):
        k_h, kh, kc = jax.random.split(k_h, 3)
        hidden_state.append(
            (0.5 * jax.random.normal(kh, (num_nodes, out_channels), jnp.float32),
             0.5 * jax.random.normal(kc, (num_nodes, out_channels), jnp.float32)))

    last_state_list = seq_gclstm_forward(x, a_norm, params, hidden_state)
    for h, c in last_state_list:
        jax.block_until_ready(h)
        jax.block_until_ready(c)

    # Shape sanity (module semantics: list of per-layer (h, c)).
    assert len(last_state_list) == num_layers
    assert all(h.shape == (num_nodes, out_channels) for h, _ in last_state_list)
    assert all(c.shape == (num_nodes, out_channels) for _, c in last_state_list)

    # Numerical check vs. pure-JAX reference (bf16-matched matmul inputs).
    ref = seq_gclstm_reference(x, a_norm, params, hidden_state)
    for (h, c), (h_ref, c_ref) in zip(last_state_list, ref):
        assert float(jnp.max(jnp.abs(h - h_ref))) < 1e-2, "h mismatch vs reference"
        assert float(jnp.max(jnp.abs(c - c_ref))) < 1e-2, "c mismatch vs reference"

    print("KERNEL_OK")
</pallas_src>

<mosaic_0001>
module attributes {stable_mosaic.version = 11 : i64} {
  func.func @_seq_gclstm_kernel(%arg0: memref<16x32xbf16, #tpu.memory_space<vmem>>, %arg1: memref<16x16xbf16, #tpu.memory_space<vmem>>, %arg2: memref<2x32x128xbf16, #tpu.memory_space<vmem>>, %arg3: memref<2x32x128xbf16, #tpu.memory_space<vmem>>, %arg4: memref<2x32x128xbf16, #tpu.memory_space<vmem>>, %arg5: memref<2x1x128xf32, #tpu.memory_space<vmem>>, %arg6: memref<2x16x32xf32, #tpu.memory_space<vmem>>, %arg7: memref<2x16x32xf32, #tpu.memory_space<vmem>>, %arg8: memref<2x16x32xf32, #tpu.memory_space<vmem>>, %arg9: memref<2x16x32xf32, #tpu.memory_space<vmem>>) attributes {dimension_semantics = [], scalar_prefetch = 0 : i64, scratch_operands = 0 : i64, tpu.core_type = #tpu.core_type<tc>} {
    %c0 = arith.constant 0 : index
    %c0_0 = arith.constant 0 : index
    %0 = vector.load %arg1[%c0, %c0_0] : memref<16x16xbf16, #tpu.memory_space<vmem>>, vector<16x16xbf16>
    %c0_1 = arith.constant 0 : index
    %c0_2 = arith.constant 0 : index
    %c0_3 = arith.constant 0 : index
    %1 = vector.load %arg6[%c0_1, %c0_2, %c0_3] : memref<2x16x32xf32, #tpu.memory_space<vmem>>, vector<1x16x32xf32>
    %2 = vector.shape_cast %1 : vector<1x16x32xf32> to vector<16x32xf32>
    %c0_4 = arith.constant 0 : index
    %c0_5 = arith.constant 0 : index
    %c0_6 = arith.constant 0 : index
    %3 = vector.load %arg7[%c0_4, %c0_5, %c0_6] : memref<2x16x32xf32, #tpu.memory_space<vmem>>, vector<1x16x32xf32>
    %4 = vector.shape_cast %3 : vector<1x16x32xf32> to vector<16x32xf32>
    %5 = arith.truncf %2 : vector<16x32xf32> to vector<16x32xbf16>
    %cst = arith.constant dense<0.000000e+00> : vector<16x32xf32>
    %6 = tpu.matmul %0, %5, %cst {dimension_numbers = #tpu.dot_dimension_numbers<[1], [0], [0], [1], [0, 0, 1, 1], [], []>} : vector<16x16xbf16>, vector<16x32xbf16>, vector<16x32xf32> -> vector<16x32xf32>
    %c0_7 = arith.constant 0 : index
    %c0_8 = arith.constant 0 : index
    %7 = vector.load %arg0[%c0_7, %c0_8] : memref<16x32xbf16, #tpu.memory_space<vmem>>, vector<16x32xbf16>
    %c0_9 = arith.constant 0 : index
    %c0_10 = arith.constant 0 : index
    %c0_11 = arith.constant 0 : index
    %8 = vector.load %arg2[%c0_9, %c0_10, %c0_11] : memref<2x32x128xbf16, #tpu.memory_space<vmem>>, vector<1x32x128xbf16>
    %9 = vector.shape_cast %8 : vector<1x32x128xbf16> to vector<32x128xbf16>
    %cst_12 = arith.constant dense<0.000000e+00> : vector<16x128xf32>
    %10 = tpu.matmul %7, %9, %cst_12 {dimension_numbers = #tpu.dot_dimension_numbers<[1], [0], [0], [1], [0, 0, 1, 1], [], []>} : vector<16x32xbf16>, vector<32x128xbf16>, vector<16x128xf32> -> vector<16x128xf32>
    %11 = arith.truncf %6 : vector<16x32xf32> to vector<16x32xbf16>
    %c0_13 = arith.constant 0 : index
    %c0_14 = arith.constant 0 : index
    %c0_15 = arith.constant 0 : index
    %12 = vector.load %arg3[%c0_13, %c0_14, %c0_15] : memref<2x32x128xbf16, #tpu.memory_space<vmem>>, vector<1x32x128xbf16>
    %13 = vector.shape_cast %12 : vector<1x32x128xbf16> to vector<32x128xbf16>
    %cst_16 = arith.constant dense<0.000000e+00> : vector<16x128xf32>
    %14 = tpu.matmul %11, %13, %cst_16 {dimension_numbers = #tpu.dot_dimension_numbers<[1], [0], [0], [1], [0, 0, 1, 1], [], []>} : vector<16x32xbf16>, vector<32x128xbf16>, vector<16x128xf32> -> vector<16x128xf32>
    %15 = arith.addf %10, %14 : vector<16x128xf32>
    %c0_17 = arith.constant 0 : index
    %c0_18 = arith.constant 0 : index
    %c0_19 = arith.constant 0 : index
    %16 = vector.load %arg4[%c0_17, %c0_18, %c0_19] : memref<2x32x128xbf16, #tpu.memory_space<vmem>>, vector<1x32x128xbf16>
    %17 = vector.shape_cast %16 : vector<1x32x128xbf16> to vector<32x128xbf16>
    %cst_20 = arith.constant dense<0.000000e+00> : vector<16x128xf32>
    %18 = tpu.matmul %5, %17, %cst_20 {dimension_numbers = #tpu.dot_dimension_numbers<[1], [0], [0], [1], [0, 0, 1, 1], [], []>} : vector<16x32xbf16>, vector<32x128xbf16>, vector<16x128xf32> -> vector<16x128xf32>
    %19 = arith.addf %15, %18 : vector<16x128xf32>
    %c0_21 = arith.constant 0 : index
    %c0_22 = arith.constant 0 : index
    %c0_23 = arith.constant 0 : index
    %20 = vector.load %arg5[%c0_21, %c0_22, %c0_23] : memref<2x1x128xf32, #tpu.memory_space<vmem>>, vector<1x1x128xf32>
    %21 = vector.shape_cast %20 : vector<1x1x128xf32> to vector<1x128xf32>
    %22 = vector.broadcast %21 : vector<1x128xf32> to vector<16x128xf32>
    %23 = arith.addf %19, %22 : vector<16x128xf32>
    %24 = vector.extract_strided_slice %23 {offsets = [0, 0], sizes = [16, 32], strides = [1, 1]} : vector<16x128xf32> to vector<16x32xf32>
    %25 = vector.extract_strided_slice %23 {offsets = [0, 32], sizes = [16, 32], strides = [1, 1]} : vector<16x128xf32> to vector<16x32xf32>
    %26 = vector.extract_strided_slice %23 {offsets = [0, 64], sizes = [16, 32], strides = [1, 1]} : vector<16x128xf32> to vector<16x32xf32>
    %27 = vector.extract_strided_slice %23 {offsets = [0, 96], sizes = [16, 32], strides = [1, 1]} : vector<16x128xf32> to vector<16x32xf32>
    %28 = arith.negf %25 : vector<16x32xf32>
    %29 = math.exp %28 : vector<16x32xf32>
    %cst_24 = arith.constant 1.000000e+00 : f32
    %30 = vector.broadcast %cst_24 : f32 to vector<16x32xf32>
    %31 = arith.addf %30, %29 : vector<16x32xf32>
    %32 = arith.divf %30, %31 : vector<16x32xf32>
    %33 = arith.mulf %32, %4 : vector<16x32xf32>
    %34 = arith.negf %24 : vector<16x32xf32>
    %35 = math.exp %34 : vector<16x32xf32>
    %cst_25 = arith.constant 1.000000e+00 : f32
    %36 = vector.broadcast %cst_25 : f32 to vector<16x32xf32>
    %37 = arith.addf %36, %35 : vector<16x32xf32>
    %38 = arith.divf %36, %37 : vector<16x32xf32>
    %39 = math.tanh %26 : vector<16x32xf32>
    %40 = arith.mulf %38, %39 : vector<16x32xf32>
    %41 = arith.addf %33, %40 : vector<16x32xf32>
    %42 = arith.negf %27 : vector<16x32xf32>
    %43 = math.exp %42 : vector<16x32xf32>
    %cst_26 = arith.constant 1.000000e+00 : f32
    %44 = vector.broadcast %cst_26 : f32 to vector<16x32xf32>
    %45 = arith.addf %44, %43 : vector<16x32xf32>
    %46 = arith.divf %44, %45 : vector<16x32xf32>
    %47 = math.tanh %41 : vector<16x32xf32>
    %48 = arith.mulf %46, %47 : vector<16x32xf32>
    %c0_27 = arith.constant 0 : index
    %c0_28 = arith.constant 0 : index
    %c0_29 = arith.constant 0 : index
    %49 = vector.load %arg8[%c0_27, %c0_28, %c0_29] : memref<2x16x32xf32, #tpu.memory_space<vmem>>, vector<1x16x32xf32>
    %50 = vector.shape_cast %49 : vector<1x16x32xf32> to vector<16x32xf32>
    %51 = vector.shape_cast %48 : vector<16x32xf32> to vector<1x16x32xf32>
    tpu.vector_store %arg8[%c0_27, %c0_28, %c0_29], %51 {strides = array<i32>} : memref<2x16x32xf32, #tpu.memory_space<vmem>>, vector<1x16x32xf32>,
    %c0_30 = arith.constant 0 : index
    %c0_31 = arith.constant 0 : index
    %c0_32 = arith.constant 0 : index
    %52 = vector.load %arg9[%c0_30, %c0_31, %c0_32] : memref<2x16x32xf32, #tpu.memory_space<vmem>>, vector<1x16x32xf32>
    %53 = vector.shape_cast %52 : vector<1x16x32xf32> to vector<16x32xf32>
    %54 = vector.shape_cast %41 : vector<16x32xf32> to vector<1x16x32xf32>
    tpu.vector_store %arg9[%c0_30, %c0_31, %c0_32], %54 {strides = array<i32>} : memref<2x16x32xf32, #tpu.memory_space<vmem>>, vector<1x16x32xf32>,
    %55 = arith.truncf %48 : vector<16x32xf32> to vector<16x32xbf16>
    %c1 = arith.constant 1 : index
    %c0_33 = arith.constant 0 : index
    %c0_34 = arith.constant 0 : index
    %56 = vector.load %arg6[%c1, %c0_33, %c0_34] : memref<2x16x32xf32, #tpu.memory_space<vmem>>, vector<1x16x32xf32>
    %57 = vector.shape_cast %56 : vector<1x16x32xf32> to vector<16x32xf32>
    %c1_35 = arith.constant 1 : index
    %c0_36 = arith.constant 0 : index
    %c0_37 = arith.constant 0 : index
    %58 = vector.load %arg7[%c1_35, %c0_36, %c0_37] : memref<2x16x32xf32, #tpu.memory_space<vmem>>, vector<1x16x32xf32>
    %59 = vector.shape_cast %58 : vector<1x16x32xf32> to vector<16x32xf32>
    %60 = arith.truncf %57 : vector<16x32xf32> to vector<16x32xbf16>
    %cst_38 = arith.constant dense<0.000000e+00> : vector<16x32xf32>
    %61 = tpu.matmul %0, %60, %cst_38 {dimension_numbers = #tpu.dot_dimension_numbers<[1], [0], [0], [1], [0, 0, 1, 1], [], []>} : vector<16x16xbf16>, vector<16x32xbf16>, vector<16x32xf32> -> vector<16x32xf32>
    %c1_39 = arith.constant 1 : index
    %c0_40 = arith.constant 0 : index
    %c0_41 = arith.constant 0 : index
    %62 = vector.load %arg2[%c1_39, %c0_40, %c0_41] : memref<2x32x128xbf16, #tpu.memory_space<vmem>>, vector<1x32x128xbf16>
    %63 = vector.shape_cast %62 : vector<1x32x128xbf16> to vector<32x128xbf16>
    %cst_42 = arith.constant dense<0.000000e+00> : vector<16x128xf32>
    %64 = tpu.matmul %55, %63, %cst_42 {dimension_numbers = #tpu.dot_dimension_numbers<[1], [0], [0], [1], [0, 0, 1, 1], [], []>} : vector<16x32xbf16>, vector<32x128xbf16>, vector<16x128xf32> -> vector<16x128xf32>
    %65 = arith.truncf %61 : vector<16x32xf32> to vector<16x32xbf16>
    %c1_43 = arith.constant 1 : index
    %c0_44 = arith.constant 0 : index
    %c0_45 = arith.constant 0 : index
    %66 = vector.load %arg3[%c1_43, %c0_44, %c0_45] : memref<2x32x128xbf16, #tpu.memory_space<vmem>>, vector<1x32x128xbf16>
    %67 = vector.shape_cast %66 : vector<1x32x128xbf16> to vector<32x128xbf16>
    %cst_46 = arith.constant dense<0.000000e+00> : vector<16x128xf32>
    %68 = tpu.matmul %65, %67, %cst_46 {dimension_numbers = #tpu.dot_dimension_numbers<[1], [0], [0], [1], [0, 0, 1, 1], [], []>} : vector<16x32xbf16>, vector<32x128xbf16>, vector<16x128xf32> -> vector<16x128xf32>
    %69 = arith.addf %64, %68 : vector<16x128xf32>
    %c1_47 = arith.constant 1 : index
    %c0_48 = arith.constant 0 : index
    %c0_49 = arith.constant 0 : index
    %70 = vector.load %arg4[%c1_47, %c0_48, %c0_49] : memref<2x32x128xbf16, #tpu.memory_space<vmem>>, vector<1x32x128xbf16>
    %71 = vector.shape_cast %70 : vector<1x32x128xbf16> to vector<32x128xbf16>
    %cst_50 = arith.constant dense<0.000000e+00> : vector<16x128xf32>
    %72 = tpu.matmul %60, %71, %cst_50 {dimension_numbers = #tpu.dot_dimension_numbers<[1], [0], [0], [1], [0, 0, 1, 1], [], []>} : vector<16x32xbf16>, vector<32x128xbf16>, vector<16x128xf32> -> vector<16x128xf32>
    %73 = arith.addf %69, %72 : vector<16x128xf32>
    %c1_51 = arith.constant 1 : index
    %c0_52 = arith.constant 0 : index
    %c0_53 = arith.constant 0 : index
    %74 = vector.load %arg5[%c1_51, %c0_52, %c0_53] : memref<2x1x128xf32, #tpu.memory_space<vmem>>, vector<1x1x128xf32>
    %75 = vector.shape_cast %74 : vector<1x1x128xf32> to vector<1x128xf32>
    %76 = vector.broadcast %75 : vector<1x128xf32> to vector<16x128xf32>
    %77 = arith.addf %73, %76 : vector<16x128xf32>
    %78 = vector.extract_strided_slice %77 {offsets = [0, 0], sizes = [16, 32], strides = [1, 1]} : vector<16x128xf32> to vector<16x32xf32>
    %79 = vector.extract_strided_slice %77 {offsets = [0, 32], sizes = [16, 32], strides = [1, 1]} : vector<16x128xf32> to vector<16x32xf32>
    %80 = vector.extract_strided_slice %77 {offsets = [0, 64], sizes = [16, 32], strides = [1, 1]} : vector<16x128xf32> to vector<16x32xf32>
    %81 = vector.extract_strided_slice %77 {offsets = [0, 96], sizes = [16, 32], strides = [1, 1]} : vector<16x128xf32> to vector<16x32xf32>
    %82 = arith.negf %79 : vector<16x32xf32>
    %83 = math.exp %82 : vector<16x32xf32>
    %cst_54 = arith.constant 1.000000e+00 : f32
    %84 = vector.broadcast %cst_54 : f32 to vector<16x32xf32>
    %85 = arith.addf %84, %83 : vector<16x32xf32>
    %86 = arith.divf %84, %85 : vector<16x32xf32>
    %87 = arith.mulf %86, %59 : vector<16x32xf32>
    %88 = arith.negf %78 : vector<16x32xf32>
    %89 = math.exp %88 : vector<16x32xf32>
    %cst_55 = arith.constant 1.000000e+00 : f32
    %90 = vector.broadcast %cst_55 : f32 to vector<16x32xf32>
    %91 = arith.addf %90, %89 : vector<16x32xf32>
    %92 = arith.divf %90, %91 : vector<16x32xf32>
    %93 = math.tanh %80 : vector<16x32xf32>
    %94 = arith.mulf %92, %93 : vector<16x32xf32>
    %95 = arith.addf %87, %94 : vector<16x32xf32>
    %96 = arith.negf %81 : vector<16x32xf32>
    %97 = math.exp %96 : vector<16x32xf32>
    %cst_56 = arith.constant 1.000000e+00 : f32
    %98 = vector.broadcast %cst_56 : f32 to vector<16x32xf32>
    %99 = arith.addf %98, %97 : vector<16x32xf32>
    %100 = arith.divf %98, %99 : vector<16x32xf32>
    %101 = math.tanh %95 : vector<16x32xf32>
    %102 = arith.mulf %100, %101 : vector<16x32xf32>
    %c1_57 = arith.constant 1 : index
    %c0_58 = arith.constant 0 : index
    %c0_59 = arith.constant 0 : index
    %103 = vector.load %arg8[%c1_57, %c0_58, %c0_59] : memref<2x16x32xf32, #tpu.memory_space<vmem>>, vector<1x16x32xf32>
    %104 = vector.shape_cast %103 : vector<1x16x32xf32> to vector<16x32xf32>
    %105 = vector.shape_cast %102 : vector<16x32xf32> to vector<1x16x32xf32>
    tpu.vector_store %arg8[%c1_57, %c0_58, %c0_59], %105 {strides = array<i32>} : memref<2x16x32xf32, #tpu.memory_space<vmem>>, vector<1x16x32xf32>,
    %c1_60 = arith.constant 1 : index
    %c0_61 = arith.constant 0 : index
    %c0_62 = arith.constant 0 : index
    %106 = vector.load %arg9[%c1_60, %c0_61, %c0_62] : memref<2x16x32xf32, #tpu.memory_space<vmem>>, vector<1x16x32xf32>
    %107 = vector.shape_cast %106 : vector<1x16x32xf32> to vector<16x32xf32>
    %108 = vector.shape_cast %95 : vector<16x32xf32> to vector<1x16x32xf32>
    tpu.vector_store %arg9[%c1_60, %c0_61, %c0_62], %108 {strides = array<i32>} : memref<2x16x32xf32, #tpu.memory_space<vmem>>, vector<1x16x32xf32>,
    return
  }
}

</mosaic_0001>

<llo_original>
// kernel: tpu_custom_call.1
$region0: #{tpu_custom_call.1}
  #allocation0 [shape = 'u32[]', space=smem, size = 0x4, offset = 0x4, fixed_abs, tag = 'smem constant byte address 0x4 - core index']
  #allocation1 [shape = 'u32[144,128]{1,0:T(1,128)}', space=vmem, size = 0x12000, scoped, tag = 'internal scratch']
  %s0 = inlined_call_operand.vmem [shape: bf16[16,32], index: 0, kind: input, shape index: {}]
  %s1 = inlined_call_operand.hbm [shape: bf16[16,16], index: 1, kind: input, shape index: {}]
  %s2 = inlined_call_operand.vmem [shape: bf16[2,32,128], index: 2, kind: input, shape index: {}]
  %s3 = inlined_call_operand.vmem [shape: bf16[2,32,128], index: 3, kind: input, shape index: {}]
  %s4 = inlined_call_operand.vmem [shape: bf16[2,32,128], index: 4, kind: input, shape index: {}]
  %s5 = inlined_call_operand.hbm [shape: f32[2,1,128], index: 5, kind: input, shape index: {}]
  %s6 = inlined_call_operand.hbm [shape: f32[2,16,32], index: 6, kind: input, shape index: {}, may-alias: {6,8}]
  %s7 = inlined_call_operand.hbm [shape: f32[2,16,32], index: 7, kind: input, shape index: {}, may-alias: {7,9}]
  %s8 = inlined_call_operand.hbm [shape: f32[2,16,32], index: 8, kind: output, shape index: {0}, may-alias: {6,8}]
  %s9 = inlined_call_operand.hbm [shape: f32[2,16,32], index: 9, kind: output, shape index: {1}, may-alias: {7,9}]
  %10 = xla_tuple %s8, %s9
  %s11 = sld [smem:[#allocation0]]
  $region66: #{tpu_custom_call.1} parent=0
    _
  %s13 = ssub.s32 1, %s11
  %s14 = scalar_select 0, %s13, %s11
  $region1: #{tpu_custom_call.1} parent=0
    #allocation2 [shape = 'u8[4096]{0}', space=vmem, size = 0x1000, scoped, tag = 'input window, operand 1, single buffered']
    #allocation3 [shape = 's32[1]{0}', space=sflag, size = 0x4, scoped, tag = 'scoped memory for tpu_custom_call.1']
    #allocation4 [shape = 's32[1]{0}', space=sflag, size = 0x4, scoped, tag = 'scoped memory for tpu_custom_call.1']
    #allocation5 [shape = 'u8[1024]{0}', space=vmem, size = 0x400, scoped, tag = 'input window, operand 5, single buffered']
    #allocation6 [shape = 's32[1]{0}', space=sflag, size = 0x4, scoped, tag = 'scoped memory for tpu_custom_call.1']
    #allocation7 [shape = 'u8[16384]{0}', space=vmem, size = 0x4000, scoped, tag = 'input window, operand 6, single buffered']
    #allocation8 [shape = 'u8[16384]{0}', space=vmem, size = 0x4000, scoped, tag = 'input window, operand 7, single buffered']
    #allocation9 [shape = 's32[1]{0}', space=sflag, size = 0x4, scoped, tag = 'scoped memory for tpu_custom_call.1']
    #allocation10 [shape = 'u8[16384]{0}', space=vmem, size = 0x4000, scoped, tag = 'output window, operand 0, single buffered']
    #allocation11 [shape = 'u8[16384]{0}', space=vmem, size = 0x4000, scoped, tag = 'output window, operand 1, single buffered']
    #allocation12 [shape = 's32[1]{0}', space=sflag, size = 0x4, scoped, tag = 'scoped memory for tpu_custom_call.1']
    %15 = vsyncpa [#allocation3], 0
    %16 = vsyncpa [#allocation6], 0
    %17 = vsyncpa [#allocation9], 0
    %18 = vsyncpa [#allocation4], 0
    %19 = vsyncpa [#allocation12], 0
    // Predicated region
    $region2: #{tpu_custom_call.1} parent=1 // pred_check
      _
    $region3: #{tpu_custom_call.1} parent=1 // pred_check_branch
      %21 = sbr.rel (0) target = $region5
    $region4: #{tpu_custom_call.1} parent=1 // pred_region
      _
    $region5: #{tpu_custom_call.1} parent=1 // pred_fallthru
      _
    // Predicated region
    $region6: #{tpu_custom_call.1} parent=1 // pred_check
      _
    $region7: #{tpu_custom_call.1} parent=1 // pred_check_branch
      %23 = sbr.rel (0) target = $region9
    $region8: #{tpu_custom_call.1} parent=1 // pred_region
      %s25 = ssub.s32 128, 128
      %26 = vsyncadd [#allocation3], %s25
      %s27 = sshll.u32 [#allocation2], 4
      %s28 = int_to_ptr.vmem [resolvable:$true] %s27
      %33 = dma.hbm_to_vmem [thread:$0]  %s1, 128, %s28, [#allocation3], 64, 64, 4
    $region9: #{tpu_custom_call.1} parent=1 // pred_fallthru
      _
    // Predicated region
    $region10: #{tpu_custom_call.1} parent=1 // pred_check
      _
    $region11: #{tpu_custom_call.1} parent=1 // pred_check_branch
      %35 = sbr.rel (0) target = $region13
    $region12: #{tpu_custom_call.1} parent=1 // pred_region
      _
    $region13: #{tpu_custom_call.1} parent=1 // pred_fallthru
      _
    // Predicated region
    $region14: #{tpu_custom_call.1} parent=1 // pred_check
      _
    $region15: #{tpu_custom_call.1} parent=1 // pred_check_branch
      %37 = sbr.rel (0) target = $region17
    $region16: #{tpu_custom_call.1} parent=1 // pred_region
      _
    $region17: #{tpu_custom_call.1} parent=1 // pred_fallthru
      _
    // Predicated region
    $region18: #{tpu_custom_call.1} parent=1 // pred_check
      _
    $region19: #{tpu_custom_call.1} parent=1 // pred_check_branch
      %39 = sbr.rel (0) target = $region21
    $region20: #{tpu_custom_call.1} parent=1 // pred_region
      _
    $region21: #{tpu_custom_call.1} parent=1 // pred_fallthru
      _
    // Predicated region
    $region22: #{tpu_custom_call.1} parent=1 // pred_check
      _
    $region23: #{tpu_custom_call.1} parent=1 // pred_check_branch
      %41 = sbr.rel (0) target = $region25
    $region24: #{tpu_custom_call.1} parent=1 // pred_region
      %s43 = ssub.s32 32, 32
      %44 = vsyncadd [#allocation6], %s43
      %s45 = sshll.u32 [#allocation5], 4
      %s46 = int_to_ptr.vmem [resolvable:$true] %s45
      %51 = dma.hbm_to_vmem [thread:$0]  %s5, 32, %s46, [#allocation6], 16, 16, 1
    $region25: #{tpu_custom_call.1} parent=1 // pred_fallthru
      _
    // Predicated region
    $region26: #{tpu_custom_call.1} parent=1 // pred_check
      _
    $region27: #{tpu_custom_call.1} parent=1 // pred_check_branch
      %53 = sbr.rel (0) target = $region29
    $region28: #{tpu_custom_call.1} parent=1 // pred_region
      %s55 = ssub.s32 512, 512
      %56 = vsyncadd [#allocation6], %s55
      %s57 = sshll.u32 [#allocation7], 4
      %s58 = int_to_ptr.vmem [resolvable:$true] %s57
      %63 = dma.hbm_to_vmem [thread:$0]  %s6, 512, %s58, [#allocation6], 128, 128, 8
    $region29: #{tpu_custom_call.1} parent=1 // pred_fallthru
      _
    // Predicated region
    $region30: #{tpu_custom_call.1} parent=1 // pred_check
      _
    $region31: #{tpu_custom_call.1} parent=1 // pred_check_branch
      %65 = sbr.rel (0) target = $region33
    $region32: #{tpu_custom_call.1} parent=1 // pred_region
      %s67 = ssub.s32 512, 512
      %68 = vsyncadd [#allocation9], %s67
      %s69 = sshll.u32 [#allocation8], 4
      %s70 = int_to_ptr.vmem [resolvable:$true] %s69
      %75 = dma.hbm_to_vmem [thread:$0]  %s7, 512, %s70, [#allocation9], 128, 128, 8
    $region33: #{tpu_custom_call.1} parent=1 // pred_fallthru
      _
    // Predicated region
    $region34: #{tpu_custom_call.1} parent=1 // pred_check
      _
    $region35: #{tpu_custom_call.1} parent=1 // pred_check_branch
      %77 = sbr.rel (0) target = $region37
    $region36: #{tpu_custom_call.1} parent=1 // pred_region
      %78 = dma.done [#allocation3], 128
    $region37: #{tpu_custom_call.1} parent=1 // pred_fallthru
      _
    // Predicated region
    $region38: #{tpu_custom_call.1} parent=1 // pred_check
      _
    $region39: #{tpu_custom_call.1} parent=1 // pred_check_branch
      %80 = sbr.rel (0) target = $region41
    $region40: #{tpu_custom_call.1} parent=1 // pred_region
      %81 = dma.done [#allocation6], 32
    $region41: #{tpu_custom_call.1} parent=1 // pred_fallthru
      _
    // Predicated region
    $region42: #{tpu_custom_call.1} parent=1 // pred_check
      _
    $region43: #{tpu_custom_call.1} parent=1 // pred_check_branch
      %83 = sbr.rel (0) target = $region45
    $region44: #{tpu_custom_call.1} parent=1 // pred_region
      %84 = dma.done [#allocation6], 512
    $region45: #{tpu_custom_call.1} parent=1 // pred_fallthru
      _
    // Predicated region
    $region46: #{tpu_custom_call.1} parent=1 // pred_check
      _
    $region47: #{tpu_custom_call.1} parent=1 // pred_check_branch
      %86 = sbr.rel (0) target = $region49
    $region48: #{tpu_custom_call.1} parent=1 // pred_region
      %87 = dma.done [#allocation9], 512
    $region49: #{tpu_custom_call.1} parent=1 // pred_fallthru
      _
    %v89 = vld [vmem:[#allocation2] sm:$0xf]
    %v90 = vld [vmem:[#allocation2 + $0x4] sm:$0xf]
    %v91 = vld [vmem:[#allocation7] sm:$0xff]
    %v92 = vld [vmem:[#allocation7 + $0x8] sm:$0xff]
    %v93 = vld [vmem:[#allocation8] sm:$0xff]
    %v94 = vld [vmem:[#allocation8 + $0x8] sm:$0xff]
    %v95 = vpack.c.bf16 %v92, %v91
    %v98 = vunpack.c.l.b16 %v89
    %v99 = vunpack.c.l.b16 %v90
    %v100 = vpack.c.b16 %v99, %v98
    %vm101 = vcmask 130048
    %v103 = vsel %vm101, %v100, 0
    %105 = vmatprep.subr.bf16.mxu0 0
    %106 = vmatpush1.bf16.msra.mxu0 0
    %107 = vmatprep.subr.bf16.mxu0 0
    %108 = vmatpush1.bf16.msra.mxu0 0
    %109 = vmatprep.subr.bf16.mxu0 0
    %110 = vmatpush1.bf16.msra.mxu0 0
    %111 = vmatprep.subr.bf16.mxu0 0
    %112 = vmatpush1.bf16.msra.mxu0 0
    %113 = vmatprep.subr.bf16.mxu0 0
    %114 = vmatpush1.bf16.msra.mxu0 0
    %115 = vmatprep.subr.bf16.mxu0 0
    %116 = vmatpush1.bf16.msra.mxu0 0
    %117 = vmatprep.subr.bf16.mxu0 0
    %118 = vmatpush1.bf16.msra.mxu0 0
    %119 = vmatprep.subr.bf16.mxu0 0
    %120 = vmatpush1.bf16.msra.mxu0 %v95
    %121 = vmatprep.subr.bf16.mxu0 0
    %122 = vmatpush2.bf16.msra.mxu0 0
    %123 = vmatprep.subr.bf16.mxu0 0
    %124 = vmatpush2.bf16.msra.mxu0 0
    %125 = vmatprep.subr.bf16.mxu0 0
    %126 = vmatpush2.bf16.msra.mxu0 0
    %127 = vmatprep.subr.bf16.mxu0 0
    %128 = vmatpush2.bf16.msra.mxu0 0
    %129 = vmatprep.subr.bf16.mxu0 0
    %130 = vmatpush2.bf16.msra.mxu0 0
    %131 = vmatprep.subr.bf16.mxu0 0
    %132 = vmatpush2.bf16.msra.mxu0 0
    %133 = vmatprep.subr.bf16.mxu0 0
    %134 = vmatpush2.bf16.msra.mxu0 0
    %135 = vmatprep.subr.bf16.mxu0 0
    %136 = vmatpush2.bf16.msra.mxu0 0
    %137 = vmatprep.mubr.bf16.mxu0 0
    %138 = vmatmul.mubr.bf16.gmra.mxu0 %v103
    %v139 = vpop.f32.mrf.mxu0
    %v140 = vadd.f32 0.0, %v139
    %v141 = vpop.f32.mrf.mxu0
    %v142 = vpop.f32.mrf.mxu0
    %v143 = vadd.f32 0.0, %v142
    %v144 = vpop.f32.mrf.mxu0
    %145 = vdwg.mxu0
    %v146 = vld [vmem:[%s0] sm:$0xf]
    %v147 = vld [vmem:[%s0 + $0x4] sm:$0xf]
    %v148 = vld [vmem:[%s2] sm:$0xf]
    %v149 = vld [vmem:[%s2 + $0x4] sm:$0xf]
    %v150 = vld [vmem:[%s2 + $0x8] sm:$0xf]
    %v151 = vld [vmem:[%s2 + $0xc] sm:$0xf]
    %v152 = vpack.c.bf16 %v143, %v140
    %v153 = vld [vmem:[%s3] sm:$0xf]
    %v154 = vld [vmem:[%s3 + $0x4] sm:$0xf]
    %v155 = vld [vmem:[%s3 + $0x8] sm:$0xf]
    %v156 = vld [vmem:[%s3 + $0xc] sm:$0xf]
    %v161 = vunpack.c.l.b16 %v153
    %v162 = vunpack.c.l.b16 %v154
    %v163 = vunpack.c.l.b16 %v155
    %v164 = vunpack.c.l.b16 %v156
    %v165 = vpack.c.b16 %v162, %v161
    %v166 = vpack.c.b16 %v164, %v163
    %vm169 = vcmask 261120
    %v171 = vsel %vm169, %v152, 0
    %173 = vmatprep.subr.bf16.mxu0 0
    %174 = vmatpush1.bf16.msra.mxu0 0
    %175 = vmatprep.subr.bf16.mxu0 0
    %176 = vmatpush1.bf16.msra.mxu0 0
    %177 = vmatprep.subr.bf16.mxu0 0
    %178 = vmatpush1.bf16.msra.mxu0 0
    %179 = vmatprep.subr.bf16.mxu0 0
    %180 = vmatpush1.bf16.msra.mxu0 0
    %181 = vmatprep.subr.bf16.mxu0 0
    %182 = vmatpush1.bf16.msra.mxu0 0
    %183 = vmatprep.subr.bf16.mxu0 0
    %184 = vmatpush1.bf16.msra.mxu0 0
    %185 = vmatprep.subr.bf16.mxu0 0
    %186 = vmatpush1.bf16.msra.mxu0 %v166
    %187 = vmatprep.subr.bf16.mxu0 0
    %188 = vmatpush1.bf16.msra.mxu0 %v165
    %189 = vmatprep.subr.bf16.mxu0 0
    %190 = vmatpush2.bf16.msra.mxu0 0
    %191 = vmatprep.subr.bf16.mxu0 0
    %192 = vmatpush2.bf16.msra.mxu0 0
    %193 = vmatprep.subr.bf16.mxu0 0
    %194 = vmatpush2.bf16.msra.mxu0 0
    %195 = vmatprep.subr.bf16.mxu0 0
    %196 = vmatpush2.bf16.msra.mxu0 0
    %197 = vmatprep.subr.bf16.mxu0 0
    %198 = vmatpush2.bf16.msra.mxu0 0
    %199 = vmatprep.subr.bf16.mxu0 0
    %200 = vmatpush2.bf16.msra.mxu0 0
    %201 = vmatprep.subr.bf16.mxu0 0
    %202 = vmatpush2.bf16.msra.mxu0 0
    %203 = vmatprep.subr.bf16.mxu0 0
    %204 = vmatpush2.bf16.msra.mxu0 0
    %205 = vmatprep.mubr.bf16.mxu0 0
    %206 = vmatmul.mubr.bf16.gmra.mxu0 %v171
    %v207 = vpop.f32.mrf.mxu0
    %v208 = vadd.f32 0.0, %v207
    %v209 = vpop.f32.mrf.mxu0
    %v210 = vpop.f32.mrf.mxu0
    %v211 = vadd.f32 0.0, %v210
    %v212 = vpop.f32.mrf.mxu0
    %213 = vdwg.mxu0
    %v216 = vunpack.c.l.b16 %v146
    %v217 = vunpack.c.l.b16 %v147
    %v218 = vpack.c.b16 %v217, %v216
    %v223 = vunpack.c.l.b16 %v148
    %v224 = vunpack.c.l.b16 %v149
    %v225 = vunpack.c.l.b16 %v150
    %v226 = vunpack.c.l.b16 %v151
    %v227 = vpack.c.b16 %v224, %v223
    %v228 = vpack.c.b16 %v226, %v225
    %v232 = vsel %vm169, %v218, 0
    %234 = vmatprep.subr.bf16.mxu0 0
    %235 = vmatpush1.bf16.msra.mxu0 0
    %236 = vmatprep.subr.bf16.mxu0 0
    %237 = vmatpush1.bf16.msra.mxu0 0
    %238 = vmatprep.subr.bf16.mxu0 0
    %239 = vmatpush1.bf16.msra.mxu0 0
    %240 = vmatprep.subr.bf16.mxu0 0
    %241 = vmatpush1.bf16.msra.mxu0 0
    %242 = vmatprep.subr.bf16.mxu0 0
    %243 = vmatpush1.bf16.msra.mxu0 0
    %244 = vmatprep.subr.bf16.mxu0 0
    %245 = vmatpush1.bf16.msra.mxu0 0
    %246 = vmatprep.subr.bf16.mxu0 0
    %247 = vmatpush1.bf16.msra.mxu0 %v228
    %248 = vmatprep.subr.bf16.mxu0 0
    %249 = vmatpush1.bf16.msra.mxu0 %v227
    %250 = vmatprep.subr.bf16.mxu0 0
    %251 = vmatpush2.bf16.msra.mxu0 0
    %252 = vmatprep.subr.bf16.mxu0 0
    %253 = vmatpush2.bf16.msra.mxu0 0
    %254 = vmatprep.subr.bf16.mxu0 0
    %255 = vmatpush2.bf16.msra.mxu0 0
    %256 = vmatprep.subr.bf16.mxu0 0
    %257 = vmatpush2.bf16.msra.mxu0 0
    %258 = vmatprep.subr.bf16.mxu0 0
    %259 = vmatpush2.bf16.msra.mxu0 0
    %260 = vmatprep.subr.bf16.mxu0 0
    %261 = vmatpush2.bf16.msra.mxu0 0
    %262 = vmatprep.subr.bf16.mxu0 0
    %263 = vmatpush2.bf16.msra.mxu0 0
    %264 = vmatprep.subr.bf16.mxu0 0
    %265 = vmatpush2.bf16.msra.mxu0 0
    %266 = vmatprep.mubr.bf16.mxu0 0
    %267 = vmatmul.mubr.bf16.gmra.mxu0 %v232
    %v268 = vpop.f32.mrf.mxu0
    %v269 = vadd.f32 %v208, %v268
    %v270 = vpop.f32.mrf.mxu0
    %v271 = vpop.f32.mrf.mxu0
    %v272 = vadd.f32 %v211, %v271
    %v273 = vpop.f32.mrf.mxu0
    %274 = vdwg.mxu0
    %v275 = vld [vmem:[%s4] sm:$0xf]
    %v276 = vld [vmem:[%s4 + $0x4] sm:$0xf]
    %v277 = vld [vmem:[%s4 + $0x8] sm:$0xf]
    %v278 = vld [vmem:[%s4 + $0xc] sm:$0xf]
    %v283 = vunpack.c.l.b16 %v275
    %v284 = vunpack.c.l.b16 %v276
    %v285 = vunpack.c.l.b16 %v277
    %v286 = vunpack.c.l.b16 %v278
    %v287 = vpack.c.b16 %v284, %v283
    %v288 = vpack.c.b16 %v286, %v285
    %v292 = vsel %vm169, %v95, 0
    %294 = vmatprep.subr.bf16.mxu0 0
    %295 = vmatpush1.bf16.msra.mxu0 0
    %296 = vmatprep.subr.bf16.mxu0 0
    %297 = vmatpush1.bf16.msra.mxu0 0
    %298 = vmatprep.subr.bf16.mxu0 0
    %299 = vmatpush1.bf16.msra.mxu0 0
    %300 = vmatprep.subr.bf16.mxu0 0
    %301 = vmatpush1.bf16.msra.mxu0 0
    %302 = vmatprep.subr.bf16.mxu0 0
    %303 = vmatpush1.bf16.msra.mxu0 0
    %304 = vmatprep.subr.bf16.mxu0 0
    %305 = vmatpush1.bf16.msra.mxu0 0
    %306 = vmatprep.subr.bf16.mxu0 0
    %307 = vmatpush1.bf16.msra.mxu0 %v288
    %308 = vmatprep.subr.bf16.mxu0 0
    %309 = vmatpush1.bf16.msra.mxu0 %v287
    %310 = vmatprep.subr.bf16.mxu0 0
    %311 = vmatpush2.bf16.msra.mxu0 0
    %312 = vmatprep.subr.bf16.mxu0 0
    %313 = vmatpush2.bf16.msra.mxu0 0
    %314 = vmatprep.subr.bf16.mxu0 0
    %315 = vmatpush2.bf16.msra.mxu0 0
    %316 = vmatprep.subr.bf16.mxu0 0
    %317 = vmatpush2.bf16.msra.mxu0 0
    %318 = vmatprep.subr.bf16.mxu0 0
    %319 = vmatpush2.bf16.msra.mxu0 0
    %320 = vmatprep.subr.bf16.mxu0 0
    %321 = vmatpush2.bf16.msra.mxu0 0
    %322 = vmatprep.subr.bf16.mxu0 0
    %323 = vmatpush2.bf16.msra.mxu0 0
    %324 = vmatprep.subr.bf16.mxu0 0
    %325 = vmatpush2.bf16.msra.mxu0 0
    %326 = vmatprep.mubr.bf16.mxu0 0
    %327 = vmatmul.mubr.bf16.gmra.mxu0 %v292
    %v328 = vpop.f32.mrf.mxu0
    %v329 = vadd.f32 0.0, %v328
    %v330 = vpop.f32.mrf.mxu0
    %v331 = vpop.f32.mrf.mxu0
    %v332 = vadd.f32 0.0, %v331
    %v333 = vpop.f32.mrf.mxu0
    %334 = vdwg.mxu0
    %v335 = vadd.f32 %v269, %v329
    %v336 = vadd.f32 %v272, %v332
    %v337 = vld [vmem:[#allocation5] sm:$0x1]
    %v339 = vlaneseq
    %v340 = vshrl.u32 %v339, 7
    %v341 = vsub.s32 0, %v340
    %v342 = vrot.slane %v337, %v341
    %v344 = vadd.f32 %v335, %v342
    %v345 = vadd.f32 %v336, %v342
    %v346 = vxor.u32 %v344, 2147483648
    %v347 = vxor.u32 %v345, 2147483648
    %v348 = vmul.f32 %v346, 1.442695
    %v349 = vpow.pop %v348
    %v350 = vmul.f32 %v347, 1.442695
    %v351 = vpow.pop %v350
    %v352 = vadd.f32 %v349, 1.0
    %v353 = vadd.f32 %v351, 1.0
    %v354 = vrcp.pop %v352
    %v355 = vmul.f32 1.0, %v354
    %v356 = vrcp.pop %v353
    %v357 = vmul.f32 1.0, %v356
    %360 = vrot.lane.b32.xlu0 %v93, 32
    %v361 = vpop.permute.xlu0 %360
    %362 = vrot.lane.b32.xlu0 %v94, 32
    %v363 = vpop.permute.xlu0 %362
    %v366 = vmul.f32 %v355, %v361
    %v367 = vmul.f32 %v357, %v363
    %v368 = vtanh.pop %v344
    %v369 = vtanh.pop %v345
    %372 = vrot.lane.b32.xlu0 %v368, 64
    %v373 = vpop.permute.xlu0 %372
    %374 = vrot.lane.b32.xlu0 %v369, 64
    %v375 = vpop.permute.xlu0 %374
    %v378 = vmul.f32 %v355, %v373
    %v379 = vmul.f32 %v357, %v375
    %382 = vrot.lane.b32.xlu0 %v378, 32
    %v383 = vpop.permute.xlu0 %382
    %384 = vrot.lane.b32.xlu0 %v379, 32
    %v385 = vpop.permute.xlu0 %384
    %v388 = vadd.f32 %v366, %v383
    %v389 = vadd.f32 %v367, %v385
    %v390 = vtanh.pop %v388
    %v391 = vtanh.pop %v389
    %394 = vrot.lane.b32.xlu0 %v390, 64
    %v395 = vpop.permute.xlu0 %394
    %396 = vrot.lane.b32.xlu0 %v391, 64
    %v397 = vpop.permute.xlu0 %396
    %v400 = vmul.f32 %v355, %v395
    %v401 = vmul.f32 %v357, %v397
    %404 = vrot.lane.b32.xlu0 %v400, 32
    %v405 = vpop.permute.xlu0 %404
    %406 = vrot.lane.b32.xlu0 %v401, 32
    %v407 = vpop.permute.xlu0 %406
    %410 = vst.msk [vmem:[#allocation10] sm:$0xff] %vm169, %v405
    %411 = vst.msk [vmem:[#allocation10 + $0x8] sm:$0xff] %vm169, %v407
    %414 = vrot.lane.b32.xlu0 %v388, 96
    %v415 = vpop.permute.xlu0 %414
    %416 = vrot.lane.b32.xlu0 %v389, 96
    %v417 = vpop.permute.xlu0 %416
    %420 = vst.msk [vmem:[#allocation11] sm:$0xff] %vm169, %v415
    %421 = vst.msk [vmem:[#allocation11 + $0x8] sm:$0xff] %vm169, %v417
    %v422 = vpack.c.bf16 %v401, %v400
    %s423 = scalar_lea.vmem [#allocation7], 16
    %v424 = vld [vmem:[%s423] sm:$0xff]
    %v425 = vld [vmem:[%s423 + $0x8] sm:$0xff]
    %s426 = scalar_lea.vmem [#allocation8], 16
    %v427 = vld [vmem:[%s426] sm:$0xff]
    %v428 = vld [vmem:[%s426 + $0x8] sm:$0xff]
    %v429 = vpack.c.bf16 %v425, %v424
    %430 = vmatprep.subr.bf16.mxu0 0
    %431 = vmatpush1.bf16.msra.mxu0 0
    %432 = vmatprep.subr.bf16.mxu0 0
    %433 = vmatpush1.bf16.msra.mxu0 0
    %434 = vmatprep.subr.bf16.mxu0 0
    %435 = vmatpush1.bf16.msra.mxu0 0
    %436 = vmatprep.subr.bf16.mxu0 0
    %437 = vmatpush1.bf16.msra.mxu0 0
    %438 = vmatprep.subr.bf16.mxu0 0
    %439 = vmatpush1.bf16.msra.mxu0 0
    %440 = vmatprep.subr.bf16.mxu0 0
    %441 = vmatpush1.bf16.msra.mxu0 0
    %442 = vmatprep.subr.bf16.mxu0 0
    %443 = vmatpush1.bf16.msra.mxu0 0
    %444 = vmatprep.subr.bf16.mxu0 0
    %445 = vmatpush1.bf16.msra.mxu0 %v429
    %446 = vmatprep.subr.bf16.mxu0 0
    %447 = vmatpush2.bf16.msra.mxu0 0
    %448 = vmatprep.subr.bf16.mxu0 0
    %449 = vmatpush2.bf16.msra.mxu0 0
    %450 = vmatprep.subr.bf16.mxu0 0
    %451 = vmatpush2.bf16.msra.mxu0 0
    %452 = vmatprep.subr.bf16.mxu0 0
    %453 = vmatpush2.bf16.msra.mxu0 0
    %454 = vmatprep.subr.bf16.mxu0 0
    %455 = vmatpush2.bf16.msra.mxu0 0
    %456 = vmatprep.subr.bf16.mxu0 0
    %457 = vmatpush2.bf16.msra.mxu0 0
    %458 = vmatprep.subr.bf16.mxu0 0
    %459 = vmatpush2.bf16.msra.mxu0 0
    %460 = vmatprep.subr.bf16.mxu0 0
    %461 = vmatpush2.bf16.msra.mxu0 0
    %462 = vmatprep.mubr.bf16.mxu0 0
    %463 = vmatmul.mubr.bf16.gmra.mxu0 %v103
    %v464 = vpop.f32.mrf.mxu0
    %v465 = vadd.f32 0.0, %v464
    %v466 = vpop.f32.mrf.mxu0
    %v467 = vpop.f32.mrf.mxu0
    %v468 = vadd.f32 0.0, %v467
    %v469 = vpop.f32.mrf.mxu0
    %470 = vdwg.mxu0
    %s471 = scalar_lea.vmem %s2, 16
    %v472 = vld [vmem:[%s471] sm:$0xf]
    %v473 = vld [vmem:[%s471 + $0x4] sm:$0xf]
    %v474 = vld [vmem:[%s471 + $0x8] sm:$0xf]
    %v475 = vld [vmem:[%s471 + $0xc] sm:$0xf]
    %v476 = vpack.c.bf16 %v468, %v465
    %s477 = scalar_lea.vmem %s3, 16
    %v478 = vld [vmem:[%s477] sm:$0xf]
    %v479 = vld [vmem:[%s477 + $0x4] sm:$0xf]
    %v480 = vld [vmem:[%s477 + $0x8] sm:$0xf]
    %v481 = vld [vmem:[%s477 + $0xc] sm:$0xf]
    %v486 = vunpack.c.l.b16 %v478
    %v487 = vunpack.c.l.b16 %v479
    %v488 = vunpack.c.l.b16 %v480
    %v489 = vunpack.c.l.b16 %v481
    %v490 = vpack.c.b16 %v487, %v486
    %v491 = vpack.c.b16 %v489, %v488
    %v495 = vsel %vm169, %v476, 0
    %497 = vmatprep.subr.bf16.mxu0 0
    %498 = vmatpush1.bf16.msra.mxu0 0
    %499 = vmatprep.subr.bf16.mxu0 0
    %500 = vmatpush1.bf16.msra.mxu0 0
    %501 = vmatprep.subr.bf16.mxu0 0
    %502 = vmatpush1.bf16.msra.mxu0 0
    %503 = vmatprep.subr.bf16.mxu0 0
    %504 = vmatpush1.bf16.msra.mxu0 0
    %505 = vmatprep.subr.bf16.mxu0 0
    %506 = vmatpush1.bf16.msra.mxu0 0
    %507 = vmatprep.subr.bf16.mxu0 0
    %508 = vmatpush1.bf16.msra.mxu0 0
    %509 = vmatprep.subr.bf16.mxu0 0
    %510 = vmatpush1.bf16.msra.mxu0 %v491
    %511 = vmatprep.subr.bf16.mxu0 0
    %512 = vmatpush1.bf16.msra.mxu0 %v490
    %513 = vmatprep.subr.bf16.mxu0 0
    %514 = vmatpush2.bf16.msra.mxu0 0
    %515 = vmatprep.subr.bf16.mxu0 0
    %516 = vmatpush2.bf16.msra.mxu0 0
    %517 = vmatprep.subr.bf16.mxu0 0
    %518 = vmatpush2.bf16.msra.mxu0 0
    %519 = vmatprep.subr.bf16.mxu0 0
    %520 = vmatpush2.bf16.msra.mxu0 0
    %521 = vmatprep.subr.bf16.mxu0 0
    %522 = vmatpush2.bf16.msra.mxu0 0
    %523 = vmatprep.subr.bf16.mxu0 0
    %524 = vmatpush2.bf16.msra.mxu0 0
    %525 = vmatprep.subr.bf16.mxu0 0
    %526 = vmatpush2.bf16.msra.mxu0 0
    %527 = vmatprep.subr.bf16.mxu0 0
    %528 = vmatpush2.bf16.msra.mxu0 0
    %529 = vmatprep.mubr.bf16.mxu0 0
    %530 = vmatmul.mubr.bf16.gmra.mxu0 %v495
    %v531 = vpop.f32.mrf.mxu0
    %v532 = vadd.f32 0.0, %v531
    %v533 = vpop.f32.mrf.mxu0
    %v534 = vpop.f32.mrf.mxu0
    %v535 = vadd.f32 0.0, %v534
    %v536 = vpop.f32.mrf.mxu0
    %537 = vdwg.mxu0
    %539 = vrot.lane.b32.xlu0 %v422, 32
    %v540 = vpop.permute.xlu0 %539
    %v545 = vunpack.c.l.b16 %v472
    %v546 = vunpack.c.l.b16 %v473
    %v547 = vunpack.c.l.b16 %v474
    %v548 = vunpack.c.l.b16 %v475
    %v549 = vpack.c.b16 %v546, %v545
    %v550 = vpack.c.b16 %v548, %v547
    %v554 = vsel %vm169, %v540, 0
    %556 = vmatprep.subr.bf16.mxu0 0
    %557 = vmatpush1.bf16.msra.mxu0 0
    %558 = vmatprep.subr.bf16.mxu0 0
    %559 = vmatpush1.bf16.msra.mxu0 0
    %560 = vmatprep.subr.bf16.mxu0 0
    %561 = vmatpush1.bf16.msra.mxu0 0
    %562 = vmatprep.subr.bf16.mxu0 0
    %563 = vmatpush1.bf16.msra.mxu0 0
    %564 = vmatprep.subr.bf16.mxu0 0
    %565 = vmatpush1.bf16.msra.mxu0 0
    %566 = vmatprep.subr.bf16.mxu0 0
    %567 = vmatpush1.bf16.msra.mxu0 0
    %568 = vmatprep.subr.bf16.mxu0 0
    %569 = vmatpush1.bf16.msra.mxu0 %v550
    %570 = vmatprep.subr.bf16.mxu0 0
    %571 = vmatpush1.bf16.msra.mxu0 %v549
    %572 = vmatprep.subr.bf16.mxu0 0
    %573 = vmatpush2.bf16.msra.mxu0 0
    %574 = vmatprep.subr.bf16.mxu0 0
    %575 = vmatpush2.bf16.msra.mxu0 0
    %576 = vmatprep.subr.bf16.mxu0 0
    %577 = vmatpush2.bf16.msra.mxu0 0
    %578 = vmatprep.subr.bf16.mxu0 0
    %579 = vmatpush2.bf16.msra.mxu0 0
    %580 = vmatprep.subr.bf16.mxu0 0
    %581 = vmatpush2.bf16.msra.mxu0 0
    %582 = vmatprep.subr.bf16.mxu0 0
    %583 = vmatpush2.bf16.msra.mxu0 0
    %584 = vmatprep.subr.bf16.mxu0 0
    %585 = vmatpush2.bf16.msra.mxu0 0
    %586 = vmatprep.subr.bf16.mxu0 0
    %587 = vmatpush2.bf16.msra.mxu0 0
    %588 = vmatprep.mubr.bf16.mxu0 0
    %589 = vmatmul.mubr.bf16.gmra.mxu0 %v554
    %v590 = vpop.f32.mrf.mxu0
    %v591 = vadd.f32 %v532, %v590
    %v592 = vpop.f32.mrf.mxu0
    %v593 = vpop.f32.mrf.mxu0
    %v594 = vadd.f32 %v535, %v593
    %v595 = vpop.f32.mrf.mxu0
    %596 = vdwg.mxu0
    %s597 = scalar_lea.vmem %s4, 16
    %v598 = vld [vmem:[%s597] sm:$0xf]
    %v599 = vld [vmem:[%s597 + $0x4] sm:$0xf]
    %v600 = vld [vmem:[%s597 + $0x8] sm:$0xf]
    %v601 = vld [vmem:[%s597 + $0xc] sm:$0xf]
    %v606 = vunpack.c.l.b16 %v598
    %v607 = vunpack.c.l.b16 %v599
    %v608 = vunpack.c.l.b16 %v600
    %v609 = vunpack.c.l.b16 %v601
    %v610 = vpack.c.b16 %v607, %v606
    %v611 = vpack.c.b16 %v609, %v608
    %v615 = vsel %vm169, %v429, 0
    %617 = vmatprep.subr.bf16.mxu0 0
    %618 = vmatpush1.bf16.msra.mxu0 0
    %619 = vmatprep.subr.bf16.mxu0 0
    %620 = vmatpush1.bf16.msra.mxu0 0
    %621 = vmatprep.subr.bf16.mxu0 0
    %622 = vmatpush1.bf16.msra.mxu0 0
    %623 = vmatprep.subr.bf16.mxu0 0
    %624 = vmatpush1.bf16.msra.mxu0 0
    %625 = vmatprep.subr.bf16.mxu0 0
    %626 = vmatpush1.bf16.msra.mxu0 0
    %627 = vmatprep.subr.bf16.mxu0 0
    %628 = vmatpush1.bf16.msra.mxu0 0
    %629 = vmatprep.subr.bf16.mxu0 0
    %630 = vmatpush1.bf16.msra.mxu0 %v611
    %631 = vmatprep.subr.bf16.mxu0 0
    %632 = vmatpush1.bf16.msra.mxu0 %v610
    %633 = vmatprep.subr.bf16.mxu0 0
    %634 = vmatpush2.bf16.msra.mxu0 0
    %635 = vmatprep.subr.bf16.mxu0 0
    %636 = vmatpush2.bf16.msra.mxu0 0
    %637 = vmatprep.subr.bf16.mxu0 0
    %638 = vmatpush2.bf16.msra.mxu0 0
    %639 = vmatprep.subr.bf16.mxu0 0
    %640 = vmatpush2.bf16.msra.mxu0 0
    %641 = vmatprep.subr.bf16.mxu0 0
    %642 = vmatpush2.bf16.msra.mxu0 0
    %643 = vmatprep.subr.bf16.mxu0 0
    %644 = vmatpush2.bf16.msra.mxu0 0
    %645 = vmatprep.subr.bf16.mxu0 0
    %646 = vmatpush2.bf16.msra.mxu0 0
    %647 = vmatprep.subr.bf16.mxu0 0
    %648 = vmatpush2.bf16.msra.mxu0 0
    %649 = vmatprep.mubr.bf16.mxu0 0
    %650 = vmatmul.mubr.bf16.gmra.mxu0 %v615
    %v651 = vpop.f32.mrf.mxu0
    %v652 = vadd.f32 0.0, %v651
    %v653 = vpop.f32.mrf.mxu0
    %v654 = vpop.f32.mrf.mxu0
    %v655 = vadd.f32 0.0, %v654
    %v656 = vpop.f32.mrf.mxu0
    %657 = vdwg.mxu0
    %v658 = vadd.f32 %v591, %v652
    %v659 = vadd.f32 %v594, %v655
    %s660 = scalar_lea.vmem [#allocation5], 1
    %v661 = vld [vmem:[%s660] sm:$0x1]
    %v663 = vlaneseq
    %v664 = vshrl.u32 %v663, 7
    %v665 = vsub.s32 0, %v664
    %v666 = vrot.slane %v661, %v665
    %v668 = vadd.f32 %v658, %v666
    %v669 = vadd.f32 %v659, %v666
    %v670 = vxor.u32 %v668, 2147483648
    %v671 = vxor.u32 %v669, 2147483648
    %v672 = vmul.f32 %v670, 1.442695
    %v673 = vpow.pop %v672
    %v674 = vmul.f32 %v671, 1.442695
    %v675 = vpow.pop %v674
    %v676 = vadd.f32 %v673, 1.0
    %v677 = vadd.f32 %v675, 1.0
    %v678 = vrcp.pop %v676
    %v679 = vmul.f32 1.0, %v678
    %v680 = vrcp.pop %v677
    %v681 = vmul.f32 1.0, %v680
    %684 = vrot.lane.b32.xlu0 %v427, 32
    %v685 = vpop.permute.xlu0 %684
    %686 = vrot.lane.b32.xlu0 %v428, 32
    %v687 = vpop.permute.xlu0 %686
    %v690 = vmul.f32 %v679, %v685
    %v691 = vmul.f32 %v681, %v687
    %v692 = vtanh.pop %v668
    %v693 = vtanh.pop %v669
    %696 = vrot.lane.b32.xlu0 %v692, 64
    %v697 = vpop.permute.xlu0 %696
    %698 = vrot.lane.b32.xlu0 %v693, 64
    %v699 = vpop.permute.xlu0 %698
    %v702 = vmul.f32 %v679, %v697
    %v703 = vmul.f32 %v681, %v699
    %706 = vrot.lane.b32.xlu0 %v702, 32
    %v707 = vpop.permute.xlu0 %706
    %708 = vrot.lane.b32.xlu0 %v703, 32
    %v709 = vpop.permute.xlu0 %708
    %v712 = vadd.f32 %v690, %v707
    %v713 = vadd.f32 %v691, %v709
    %v714 = vtanh.pop %v712
    %v715 = vtanh.pop %v713
    %718 = vrot.lane.b32.xlu0 %v714, 64
    %v719 = vpop.permute.xlu0 %718
    %720 = vrot.lane.b32.xlu0 %v715, 64
    %v721 = vpop.permute.xlu0 %720
    %v724 = vmul.f32 %v679, %v719
    %v725 = vmul.f32 %v681, %v721
    %728 = vrot.lane.b32.xlu0 %v724, 32
    %v729 = vpop.permute.xlu0 %728
    %730 = vrot.lane.b32.xlu0 %v725, 32
    %v731 = vpop.permute.xlu0 %730
    %s734 = scalar_lea.vmem [#allocation10], 16
    %735 = vst.msk [vmem:[%s734] sm:$0xff] %vm169, %v729
    %736 = vst.msk [vmem:[%s734 + $0x8] sm:$0xff] %vm169, %v731
    %739 = vrot.lane.b32.xlu0 %v712, 96
    %v740 = vpop.permute.xlu0 %739
    %741 = vrot.lane.b32.xlu0 %v713, 96
    %v742 = vpop.permute.xlu0 %741
    %s745 = scalar_lea.vmem [#allocation11], 16
    %746 = vst.msk [vmem:[%s745] sm:$0xff] %vm169, %v740
    %747 = vst.msk [vmem:[%s745 + $0x8] sm:$0xff] %vm169, %v742
    // Predicated region
    $region50: #{tpu_custom_call.1} parent=1 // pred_check
      _
    $region51: #{tpu_custom_call.1} parent=1 // pred_check_branch
      %749 = sbr.rel (0) target = $region53
    $region52: #{tpu_custom_call.1} parent=1 // pred_region
      %s751 = ssub.s32 512, 512
      %752 = vsyncadd [#allocation4], %s751
      %s753 = sshll.u32 [#allocation10], 4
      %s754 = int_to_ptr.vmem [resolvable:$true] %s753
      %759 = dma.vmem_to_hbm [thread:$0]  %s754, 512, %s8, [#allocation4], 128, 128, 8
    $region53: #{tpu_custom_call.1} parent=1 // pred_fallthru
      _
    // Predicated region
    $region54: #{tpu_custom_call.1} parent=1 // pred_check
      _
    $region55: #{tpu_custom_call.1} parent=1 // pred_check_branch
      %761 = sbr.rel (0) target = $region57
    $region56: #{tpu_custom_call.1} parent=1 // pred_region
      %s763 = ssub.s32 512, 512
      %764 = vsyncadd [#allocation12], %s763
      %s765 = sshll.u32 [#allocation11], 4
      %s766 = int_to_ptr.vmem [resolvable:$true] %s765
      %771 = dma.vmem_to_hbm [thread:$0]  %s766, 512, %s9, [#allocation12], 128, 128, 8
    $region57: #{tpu_custom_call.1} parent=1 // pred_fallthru
      _
    // Predicated region
    $region58: #{tpu_custom_call.1} parent=1 // pred_check
      _
    $region59: #{tpu_custom_call.1} parent=1 // pred_check_branch
      %773 = sbr.rel (0) target = $region61
    $region60: #{tpu_custom_call.1} parent=1 // pred_region
      %774 = dma.done [#allocation4], 512
    $region61: #{tpu_custom_call.1} parent=1 // pred_fallthru
      _
    // Predicated region
    $region62: #{tpu_custom_call.1} parent=1 // pred_check
      _
    $region63: #{tpu_custom_call.1} parent=1 // pred_check_branch
      %776 = sbr.rel (0) target = $region65
    $region64: #{tpu_custom_call.1} parent=1 // pred_region
      %777 = dma.done [#allocation12], 512
    $region65: #{tpu_custom_call.1} parent=1 // pred_fallthru
      _
    %778 = vsyncpa [#allocation3], 1
    %779 = vsyncpa [#allocation6], 1
    %780 = vsyncpa [#allocation9], 1
    %781 = vsyncpa [#allocation4], 1
    %782 = vsyncpa [#allocation12], 1

</llo_original>
